<compile_context>
chip_gen: v6e
topology: v6e:2x2x1
jax: 0.10.0
libtpu: 0.0.40
codegen_flags: <defaults>
</compile_context>

<pallas_src>
import jax
import jax.numpy as jnp
from jax.experimental import pallas as pl
from jax.experimental.pallas import tpu as pltpu

CIN, COUT, K = 3, 16, 3
CIN_PAD = 8                      # pad contraction channels 3 -> 8
COUT_PAD = 128                   # lane-dense output / MXU-native N
KDIM = 128                       # fused contraction: 9*8 = 72 taps + 1 bias col -> 128
H, W = 16, 16
STRIDE = 2
OH = OW = (H + 2 - K) // STRIDE + 1          # 8
PH = PW = OH // 2                            # 4 (after 2x2 maxpool)
NROWS = OH * OW                              # 64 conv output positions


def conv_pool_relu_kernel(p_ref, w_ref, o_ref):
    # p_ref: (64, 128)  im2col patches; col tap*8+c = xpad[2*oh+kh, 2*ow+kw, c],
    #                   col 72 = 1.0 (bias column), cols 73..127 = 0.
    # w_ref: (128, 128) fused weights; row tap*8+c = conv weight, row 72 = bias.
    # o_ref: (64, 128)  pooled+ReLU values; pooled (ph,pw) lives at row 16*ph+2*pw.

    # Single fused MXU dot: all 9 conv taps + bias accumulate inside the
    # systolic array (deep K=128 contraction instead of 9 shallow K=8 dots).
    conv = jnp.dot(p_ref[...], w_ref[...], preferred_element_type=jnp.float32)

    # 2x2 / stride-2 maxpool via two XLU sublane rolls + VPU max:
    #   h[r] = max(conv[r], conv[r+1])   (roll shift 63 == -1 mod 64)
    #   m[r] = max(h[r],    h[r+8])      (roll shift 56 == -8 mod 64)
    # so m[16*ph+2*pw] = max over the 2x2 window {0,1,8,9}.  Wrap-around rows
    # are never gathered by the wrapper, so they don't matter.
    h = jnp.maximum(conv, pltpu.roll(conv, shift=NROWS - 1, axis=0))
    m = jnp.maximum(h, pltpu.roll(h, shift=NROWS - OW, axis=0))

    # ReLU; full lane-dense (64,128) store -> unmasked vst.
    o_ref[...] = jnp.maximum(m, 0.0)


def _build_patches(x_nchw):
    """im2col for the stride-2 / pad-1 / 3x3 conv as a lane-dense (64,128) block.

    Row oh*8+ow; column tap*8 + c (tap = kh*3+kw) = xpad[2*oh+kh, 2*ow+kw, c];
    column 72 = 1.0 (bias column); remaining columns zero.
    """
    x_hwc = jnp.transpose(x_nchw[0], (1, 2, 0)).astype(jnp.float32)       # (16,16,3)
    xp = jnp.pad(x_hwc, ((1, 1), (1, 1), (0, CIN_PAD - CIN)))             # (18,18,8)
    taps = [
        xp[kh:kh + 2 * OH:2, kw:kw + 2 * OW:2, :].reshape(NROWS, CIN_PAD)
        for kh in range(K) for kw in range(K)
    ]                                                                     # 9 x (64,8)
    taps.append(jnp.ones((NROWS, 1), jnp.float32))                        # bias column
    patches = jnp.concatenate(taps, axis=1)                               # (64,73)
    return jnp.pad(patches, ((0, 0), (0, KDIM - patches.shape[1])))       # (64,128)


def _build_weights(w_oihw, bias):
    """Fused (128,128) weight matrix matching the patch layout (bias = row 72)."""
    w_taps = jnp.transpose(w_oihw, (2, 3, 1, 0)).reshape(K * K, CIN, COUT)
    w_taps = jnp.pad(w_taps, ((0, 0), (0, CIN_PAD - CIN), (0, 0)))
    w_taps = w_taps.reshape(K * K * CIN_PAD, COUT)                        # (72,16)
    w_full = jnp.concatenate([w_taps, bias.reshape(1, COUT)], axis=0)     # (73,16)
    return jnp.pad(w_full, ((0, KDIM - w_full.shape[0]),
                            (0, COUT_PAD - COUT)))                        # (128,128)


@jax.jit
def model_forward(x_nchw, w_oihw, bias):
    patches = _build_patches(x_nchw)
    weights = _build_weights(w_oihw, bias)

    out = pl.pallas_call(
        conv_pool_relu_kernel,
        out_shape=jax.ShapeDtypeStruct((NROWS, COUT_PAD), jnp.float32),
        in_specs=[
            pl.BlockSpec(memory_space=pltpu.MemorySpace.VMEM),
            pl.BlockSpec(memory_space=pltpu.MemorySpace.VMEM),
        ],
        out_specs=pl.BlockSpec(memory_space=pltpu.MemorySpace.VMEM),
    )(patches, weights)

    # Wrapper glue: pooled value (ph,pw) sits at row 16*ph + 2*pw; keep the
    # first 16 (real) channels and rearrange to NCHW (1, 16, 4, 4).
    pooled = out.reshape(PH, 2, PW, 2, COUT_PAD)[:, 0, :, 0, :COUT]       # (4,4,16)
    return jnp.transpose(pooled, (2, 0, 1)).reshape(1, COUT, PH, PW)


def reference_forward(x_nchw, w_oihw, bias):
    conv = jax.lax.conv_general_dilated(
        x_nchw, w_oihw, window_strides=(STRIDE, STRIDE),
        padding=((1, 1), (1, 1)),
        dimension_numbers=("NCHW", "OIHW", "NCHW"),
    ) + bias.reshape(1, COUT, 1, 1)
    pooled = jax.lax.reduce_window(
        conv, -jnp.inf, jax.lax.max,
        window_dimensions=(1, 1, 2, 2), window_strides=(1, 1, 2, 2),
        padding="VALID",
    )
    return jnp.maximum(pooled, 0.0)


if __name__ == "__main__":
    key = jax.random.PRNGKey(0)
    kx, kw, kb = jax.random.split(key, 3)
    x = jax.random.normal(kx, (1, CIN, H, W), dtype=jnp.float32)
    # Deterministic synthetic parameters (same shapes as the torch Conv2d).
    w = jax.random.normal(kw, (COUT, CIN, K, K), dtype=jnp.float32) * 0.1
    b = jax.random.normal(kb, (COUT,), dtype=jnp.float32) * 0.1

    out = model_forward(x, w, b)
    jax.block_until_ready(out)

    ref = reference_forward(x, w, b)
    assert out.shape == (1, COUT, PH, PW)
    assert jnp.allclose(out, ref, atol=2e-5, rtol=2e-5)

    print("KERNEL_OK")
</pallas_src>

<mosaic_0001>
module attributes {stable_mosaic.version = 11 : i64} {
  func.func @conv_pool_relu_kernel(%arg0: memref<64x128xf32, #tpu.memory_space<vmem>>, %arg1: memref<128x128xf32, #tpu.memory_space<vmem>>, %arg2: memref<64x128xf32, #tpu.memory_space<vmem>>) attributes {dimension_semantics = [], scalar_prefetch = 0 : i64, scratch_operands = 0 : i64, tpu.core_type = #tpu.core_type<tc>} {
    %c0 = arith.constant 0 : index
    %c0_0 = arith.constant 0 : index
    %0 = vector.load %arg0[%c0, %c0_0] : memref<64x128xf32, #tpu.memory_space<vmem>>, vector<64x128xf32>
    %c0_1 = arith.constant 0 : index
    %c0_2 = arith.constant 0 : index
    %1 = vector.load %arg1[%c0_1, %c0_2] : memref<128x128xf32, #tpu.memory_space<vmem>>, vector<128x128xf32>
    %cst = arith.constant dense<0.000000e+00> : vector<64x128xf32>
    %2 = tpu.matmul %0, %1, %cst {dimension_numbers = #tpu.dot_dimension_numbers<[1], [0], [0], [1], [0, 0, 1, 1], [], []>} : vector<64x128xf32>, vector<128x128xf32>, vector<64x128xf32> -> vector<64x128xf32>
    %c63_i32 = arith.constant 63 : i32
    %3 = tpu.dynamic_rotate %2 by %c63_i32 dim 0 : vector<64x128xf32>, i32 -> vector<64x128xf32>
    %4 = arith.maximumf %2, %3 : vector<64x128xf32>
    %c56_i32 = arith.constant 56 : i32
    %5 = tpu.dynamic_rotate %4 by %c56_i32 dim 0 : vector<64x128xf32>, i32 -> vector<64x128xf32>
    %6 = arith.maximumf %4, %5 : vector<64x128xf32>
    %cst_3 = arith.constant 0.000000e+00 : f32
    %7 = vector.broadcast %cst_3 : f32 to vector<64x128xf32>
    %8 = arith.maximumf %6, %7 : vector<64x128xf32>
    %c0_4 = arith.constant 0 : index
    %c0_5 = arith.constant 0 : index
    %9 = vector.load %arg2[%c0_4, %c0_5] : memref<64x128xf32, #tpu.memory_space<vmem>>, vector<64x128xf32>
    tpu.vector_store %arg2[%c0_4, %c0_5], %8 {strides = array<i32>} : memref<64x128xf32, #tpu.memory_space<vmem>>, vector<64x128xf32>,
    return
  }
}

</mosaic_0001>

<llo_original>
// kernel: model_forward.1
$region0: #{model_forward.1}
  #allocation0 [shape = 'u32[]', space=smem, size = 0x4, offset = 0x4, fixed_abs, tag = 'smem constant byte address 0x4 - core index']
  #allocation1 [shape = 'u32[144,128]{1,0:T(1,128)}', space=vmem, size = 0x12000, scoped, tag = 'internal scratch']
  %s0 = inlined_call_operand.vmem [shape: f32[64,128], index: 0, kind: input, shape index: {}]
  %s1 = inlined_call_operand.vmem [shape: f32[128,128], index: 1, kind: input, shape index: {}]
  %s2 = inlined_call_operand.vmem [shape: f32[64,128], index: 2, kind: output, shape index: {}]
  %s3 = sld [smem:[#allocation0]]
  $region18: #{model_forward.1} parent=0
    _
  %s5 = ssub.s32 1, %s3
  %s6 = scalar_select 0, %s5, %s3
  // Predicated region
  $region2: #{model_forward.1} parent=0 // pred_check
    _
  $region3: #{model_forward.1} parent=0 // pred_check_branch
    %8 = sbr.rel (0) target = $region5
  $region4: #{model_forward.1} parent=0 // pred_region
    _
  $region5: #{model_forward.1} parent=0 // pred_fallthru
    _
  // Predicated region
  $region6: #{model_forward.1} parent=0 // pred_check
    _
  $region7: #{model_forward.1} parent=0 // pred_check_branch
    %10 = sbr.rel (0) target = $region9
  $region8: #{model_forward.1} parent=0 // pred_region
    _
  $region9: #{model_forward.1} parent=0 // pred_fallthru
    _
  %v11 = vld [vmem:[%s0] sm:$0xff]
  %v12 = vld [vmem:[%s0 + $0x8] sm:$0xff]
  %v13 = vld [vmem:[%s0 + $0x10] sm:$0xff]
  %v14 = vld [vmem:[%s0 + $0x18] sm:$0xff]
  %v15 = vld [vmem:[%s0 + $0x20] sm:$0xff]
  %v16 = vld [vmem:[%s0 + $0x28] sm:$0xff]
  %v17 = vld [vmem:[%s0 + $0x30] sm:$0xff]
  %v18 = vld [vmem:[%s0 + $0x38] sm:$0xff]
  %v19 = vld [vmem:[%s1] sm:$0xff]
  %v20 = vld [vmem:[%s1 + $0x8] sm:$0xff]
  %v21 = vld [vmem:[%s1 + $0x10] sm:$0xff]
  %v22 = vld [vmem:[%s1 + $0x18] sm:$0xff]
  %v23 = vld [vmem:[%s1 + $0x20] sm:$0xff]
  %v24 = vld [vmem:[%s1 + $0x28] sm:$0xff]
  %v25 = vld [vmem:[%s1 + $0x30] sm:$0xff]
  %v26 = vld [vmem:[%s1 + $0x38] sm:$0xff]
  %v27 = vld [vmem:[%s1 + $0x40] sm:$0xff]
  %v28 = vld [vmem:[%s1 + $0x48] sm:$0xff]
  %v29 = vld [vmem:[%s1 + $0x50] sm:$0xff]
  %v30 = vld [vmem:[%s1 + $0x58] sm:$0xff]
  %v31 = vld [vmem:[%s1 + $0x60] sm:$0xff]
  %v32 = vld [vmem:[%s1 + $0x68] sm:$0xff]
  %v33 = vld [vmem:[%s1 + $0x70] sm:$0xff]
  %v34 = vld [vmem:[%s1 + $0x78] sm:$0xff]
  %35 = vmatprep.subr.mxu0 0.0
  %36 = vmatpush1.msra.mxu0 %v34
  %37 = vmatprep.subr.mxu0 0.0
  %38 = vmatpush1.msra.mxu0 %v33
  %39 = vmatprep.subr.mxu0 0.0
  %40 = vmatpush1.msra.mxu0 %v32
  %41 = vmatprep.subr.mxu0 0.0
  %42 = vmatpush1.msra.mxu0 %v31
  %43 = vmatprep.subr.mxu0 0.0
  %44 = vmatpush1.msra.mxu0 %v30
  %45 = vmatprep.subr.mxu0 0.0
  %46 = vmatpush1.msra.mxu0 %v29
  %47 = vmatprep.subr.mxu0 0.0
  %48 = vmatpush1.msra.mxu0 %v28
  %49 = vmatprep.subr.mxu0 0.0
  %50 = vmatpush1.msra.mxu0 %v27
  %51 = vmatprep.subr.mxu0 0.0
  %52 = vmatpush1.msra.mxu0 %v26
  %53 = vmatprep.subr.mxu0 0.0
  %54 = vmatpush1.msra.mxu0 %v25
  %55 = vmatprep.subr.mxu0 0.0
  %56 = vmatpush1.msra.mxu0 %v24
  %57 = vmatprep.subr.mxu0 0.0
  %58 = vmatpush1.msra.mxu0 %v23
  %59 = vmatprep.subr.mxu0 0.0
  %60 = vmatpush1.msra.mxu0 %v22
  %61 = vmatprep.subr.mxu0 0.0
  %62 = vmatpush1.msra.mxu0 %v21
  %63 = vmatprep.subr.mxu0 0.0
  %64 = vmatpush1.msra.mxu0 %v20
  %65 = vmatprep.subr.mxu0 0.0
  %66 = vmatpush1.msra.mxu0 %v19
  %67 = vmatprep.subr.mxu0 0.0
  %68 = vmatpush2.msra.mxu0 0.0
  %69 = vmatprep.subr.mxu0 0.0
  %70 = vmatpush2.msra.mxu0 0.0
  %71 = vmatprep.subr.mxu0 0.0
  %72 = vmatpush2.msra.mxu0 0.0
  %73 = vmatprep.subr.mxu0 0.0
  %74 = vmatpush2.msra.mxu0 0.0
  %75 = vmatprep.subr.mxu0 0.0
  %76 = vmatpush2.msra.mxu0 0.0
  %77 = vmatprep.subr.mxu0 0.0
  %78 = vmatpush2.msra.mxu0 0.0
  %79 = vmatprep.subr.mxu0 0.0
  %80 = vmatpush2.msra.mxu0 0.0
  %81 = vmatprep.subr.mxu0 0.0
  %82 = vmatpush2.msra.mxu0 0.0
  %83 = vmatprep.subr.mxu0 0.0
  %84 = vmatpush2.msra.mxu0 0.0
  %85 = vmatprep.subr.mxu0 0.0
  %86 = vmatpush2.msra.mxu0 0.0
  %87 = vmatprep.subr.mxu0 0.0
  %88 = vmatpush2.msra.mxu0 0.0
  %89 = vmatprep.subr.mxu0 0.0
  %90 = vmatpush2.msra.mxu0 0.0
  %91 = vmatprep.subr.mxu0 0.0
  %92 = vmatpush2.msra.mxu0 0.0
  %93 = vmatprep.subr.mxu0 0.0
  %94 = vmatpush2.msra.mxu0 0.0
  %95 = vmatprep.subr.mxu0 0.0
  %96 = vmatpush2.msra.mxu0 0.0
  %97 = vmatprep.subr.mxu0 0.0
  %98 = vmatpush2.msra.mxu0 0.0
  %99 = vmatprep.mubr.f32.mxu0 0.0
  %100 = vmatmul.mubr.f32.gmra.mxu0 %v11
  %v101 = vpop.f32.mrf.mxu0
  %v102 = vadd.f32 0.0, %v101
  %v103 = vpop.f32.mrf.mxu0
  %104 = vmatprep.mubr.f32.mxu0 0.0
  %105 = vmatmul.mubr.f32.gmra.mxu0 %v12
  %v106 = vpop.f32.mrf.mxu0
  %v107 = vadd.f32 0.0, %v106
  %v108 = vpop.f32.mrf.mxu0
  %109 = vmatprep.mubr.f32.mxu0 0.0
  %110 = vmatmul.mubr.f32.gmra.mxu0 %v13
  %v111 = vpop.f32.mrf.mxu0
  %v112 = vadd.f32 0.0, %v111
  %v113 = vpop.f32.mrf.mxu0
  %114 = vmatprep.mubr.f32.mxu0 0.0
  %115 = vmatmul.mubr.f32.gmra.mxu0 %v14
  %v116 = vpop.f32.mrf.mxu0
  %v117 = vadd.f32 0.0, %v116
  %v118 = vpop.f32.mrf.mxu0
  %119 = vmatprep.mubr.f32.mxu0 0.0
  %120 = vmatmul.mubr.f32.gmra.mxu0 %v15
  %v121 = vpop.f32.mrf.mxu0
  %v122 = vadd.f32 0.0, %v121
  %v123 = vpop.f32.mrf.mxu0
  %124 = vmatprep.mubr.f32.mxu0 0.0
  %125 = vmatmul.mubr.f32.gmra.mxu0 %v16
  %v126 = vpop.f32.mrf.mxu0
  %v127 = vadd.f32 0.0, %v126
  %v128 = vpop.f32.mrf.mxu0
  %129 = vmatprep.mubr.f32.mxu0 0.0
  %130 = vmatmul.mubr.f32.gmra.mxu0 %v17
  %v131 = vpop.f32.mrf.mxu0
  %v132 = vadd.f32 0.0, %v131
  %v133 = vpop.f32.mrf.mxu0
  %134 = vmatprep.mubr.f32.mxu0 0.0
  %135 = vmatmul.mubr.f32.gmra.mxu0 %v18
  %v136 = vpop.f32.mrf.mxu0
  %v137 = vadd.f32 0.0, %v136
  %v138 = vpop.f32.mrf.mxu0
  %139 = vdwg.mxu0
  %v140 = vrot.slane %v102, 1
  %v141 = vrot.slane %v107, 1
  %v142 = vrot.slane %v112, 1
  %v143 = vrot.slane %v117, 1
  %v144 = vrot.slane %v122, 1
  %v145 = vrot.slane %v127, 1
  %v146 = vrot.slane %v132, 1
  %v147 = vrot.slane %v137, 1
  %v148 = vlaneseq
  %v149 = vshrl.u32 %v148, 7
  %vm150 = vcmp.lt.s32.totalorder %v149, 7
  %v151 = vsel %vm150, %v146, %v147
  %v152 = vsel %vm150, %v145, %v146
  %v153 = vsel %vm150, %v144, %v145
  %v154 = vsel %vm150, %v143, %v144
  %v155 = vsel %vm150, %v142, %v143
  %v156 = vsel %vm150, %v141, %v142
  %v157 = vsel %vm150, %v140, %v141
  %v158 = vsel %vm150, %v147, %v140
  %v159 = vmax.f32 %v102, %v157
  %v160 = vmax.f32 %v107, %v156
  %v161 = vmax.f32 %v112, %v155
  %v162 = vmax.f32 %v117, %v154
  %v163 = vmax.f32 %v122, %v153
  %v164 = vmax.f32 %v127, %v152
  %v165 = vmax.f32 %v132, %v151
  %v166 = vmax.f32 %v137, %v158
  %v167 = vmax.f32 %v159, %v160
  %v168 = vmax.f32 %v160, %v161
  %v169 = vmax.f32 %v161, %v162
  %v170 = vmax.f32 %v162, %v163
  %v171 = vmax.f32 %v163, %v164
  %v172 = vmax.f32 %v164, %v165
  %v173 = vmax.f32 %v165, %v166
  %v174 = vmax.f32 %v166, %v159
  %v175 = vmax.f32 %v167, 0.0
  %v176 = vmax.f32 %v168, 0.0
  %v177 = vmax.f32 %v169, 0.0
  %v178 = vmax.f32 %v170, 0.0
  %v179 = vmax.f32 %v171, 0.0
  %v180 = vmax.f32 %v172, 0.0
  %v181 = vmax.f32 %v173, 0.0
  %v182 = vmax.f32 %v174, 0.0
  %183 = vst [vmem:[%s2] sm:$0xff] %v175
  %184 = vst [vmem:[%s2 + $0x8] sm:$0xff] %v176
  %185 = vst [vmem:[%s2 + $0x10] sm:$0xff] %v177
  %186 = vst [vmem:[%s2 + $0x18] sm:$0xff] %v178
  %187 = vst [vmem:[%s2 + $0x20] sm:$0xff] %v179
  %188 = vst [vmem:[%s2 + $0x28] sm:$0xff] %v180
  %189 = vst [vmem:[%s2 + $0x30] sm:$0xff] %v181
  %190 = vst [vmem:[%s2 + $0x38] sm:$0xff] %v182
  // Predicated region
  $region10: #{model_forward.1} parent=0 // pred_check
    _
  $region11: #{model_forward.1} parent=0 // pred_check_branch
    %192 = sbr.rel (0) target = $region13
  $region12: #{model_forward.1} parent=0 // pred_region
    _
  $region13: #{model_forward.1} parent=0 // pred_fallthru
    _
  // Predicated region
  $region14: #{model_forward.1} parent=0 // pred_check
    _
  $region15: #{model_forward.1} parent=0 // pred_check_branch
    %194 = sbr.rel (0) target = $region17
  $region16: #{model_forward.1} parent=0 // pred_region
    _
  $region17: #{model_forward.1} parent=0 // pred_fallthru
    _

</llo_original>
